<compile_context>
chip_gen: v7x
topology: tpu7x:2x2x1
jax: 0.10.0
libtpu: 0.0.40
codegen_flags: <defaults>
</compile_context>

<pallas_src>
import jax
import jax.numpy as jnp
from jax.experimental import pallas as pl
from jax.experimental.pallas import tpu as pltpu

LANE = 128                 # TPU lane width (last dim of every vreg)
SUBLANE = 8                # f32 sublane count
TARGET_TILE_ROWS = 2048    # 2048 x 128 x 4 B = 1 MiB per f32 tile
                           # (in + out, double-buffered => ~4 MiB VMEM: safe on v7x)


def _identity_kernel(x_ref, o_ref):
    # The entire XuNet.forward: element-wise pass-through of one tile.
    o_ref[...] = x_ref[...]


def xunet_forward(x):
    """Pallas implementation of XuNet.forward (identity) for any input shape."""
    orig_shape = x.shape
    total = x.size

    # Lane-dense slab: (rows, 128); pad rows up to a sublane multiple so the
    # (8, 128) block constraint is satisfied without relying on the
    # full-extent exception.
    rows = pl.cdiv(total, LANE)
    rows_padded = ((rows + SUBLANE - 1) // SUBLANE) * SUBLANE
    padded_total = rows_padded * LANE

    flat = x.reshape(-1)
    if padded_total != total:
        flat = jnp.pad(flat, (0, padded_total - total))
    slab = flat.reshape(rows_padded, LANE)

    # Tile the row axis; TARGET_TILE_ROWS is a multiple of 8, and so is
    # rows_padded, so the block shape is always (8,128)-aligned. Partial
    # trailing blocks (rows_padded % tile_rows != 0) are handled by Pallas.
    tile_rows = min(TARGET_TILE_ROWS, rows_padded)
    grid = (pl.cdiv(rows_padded, tile_rows),)

    out_slab = pl.pallas_call(
        _identity_kernel,
        out_shape=jax.ShapeDtypeStruct((rows_padded, LANE), x.dtype),
        grid=grid,
        in_specs=[pl.BlockSpec((tile_rows, LANE), lambda i: (i, 0))],
        out_specs=pl.BlockSpec((tile_rows, LANE), lambda i: (i, 0)),
        # Identity => output can live in the (internal) input slab buffer.
        input_output_aliases={0: 0},
        compiler_params=pltpu.CompilerParams(
            dimension_semantics=("parallel",),
        ),
    )(slab)

    out_flat = out_slab.reshape(-1)
    if padded_total != total:
        out_flat = out_flat[:total]
    return out_flat.reshape(orig_shape)


# jit the wrapper so the aliased slab buffer is a computation-internal
# intermediate (the caller's `x` buffer is never donated/invalidated).
xunet_forward_jit = jax.jit(xunet_forward)


if __name__ == "__main__":
    key = jax.random.PRNGKey(0)
    # Small NCHW input consistent with the module (in_channels=3 default).
    x = jax.random.normal(key, (2, 3, 16, 16), dtype=jnp.float32)

    y = xunet_forward_jit(x)
    y = jax.block_until_ready(y)

    # Verify identity semantics against the reference forward (return x).
    assert y.shape == x.shape and y.dtype == x.dtype
    assert bool(jnp.array_equal(y, x))

    print("KERNEL_OK")
</pallas_src>

<mosaic_0001>
module attributes {stable_mosaic.version = 11 : i64} {
  func.func @_identity_kernel(%arg0: i32, %arg1: memref<16x128xf32, #tpu.memory_space<vmem>>, %arg2: memref<16x128xf32, #tpu.memory_space<vmem>>) attributes {dimension_semantics = [#tpu.dimension_semantics<parallel>], iteration_bounds = array<i64: 1>, scalar_prefetch = 0 : i64, scratch_operands = 0 : i64, tpu.core_type = #tpu.core_type<tc>, window_params = [{transform_indices = @transform_0, window_bounds = array<i64: 16, 128>}, {transform_indices = @transform_1, window_bounds = array<i64: 16, 128>}]} {
    %c0 = arith.constant 0 : index
    %c0_0 = arith.constant 0 : index
    %0 = vector.load %arg1[%c0, %c0_0] : memref<16x128xf32, #tpu.memory_space<vmem>>, vector<16x128xf32>
    %c0_1 = arith.constant 0 : index
    %c0_2 = arith.constant 0 : index
    %1 = vector.load %arg2[%c0_1, %c0_2] : memref<16x128xf32, #tpu.memory_space<vmem>>, vector<16x128xf32>
    tpu.vector_store %arg2[%c0_1, %c0_2], %0 {strides = array<i32>} : memref<16x128xf32, #tpu.memory_space<vmem>>, vector<16x128xf32>,
    return
  }
  func.func @transform_0(%arg0: i32) -> (i32, i32) {
    %c0_i32 = arith.constant 0 : i32
    %c0_i32_0 = arith.constant 0 : i32
    return %arg0, %c0_i32 : i32, i32
  }
  func.func @transform_1(%arg0: i32) -> (i32, i32) {
    %c0_i32 = arith.constant 0 : i32
    %c0_i32_0 = arith.constant 0 : i32
    return %arg0, %c0_i32 : i32, i32
  }
}

</mosaic_0001>

<llo_original>
// kernel: xunet_forward.1
$region0: #{xunet_forward.1}
  #allocation0 [shape = 'u32[]', space=smem, size = 0x4, offset = 0x4, fixed_abs, tag = 'smem constant byte address 0x4 - core index']
  #allocation1 [shape = 'u32[144,128]{1,0:T(1,128)}', space=vmem, size = 0x12000, scoped, tag = 'internal scratch']
  %s0 = inlined_call_operand.vmem [shape: f32[16,128], index: 0, kind: input, shape index: {}, may-alias: {0,1}]
  %s1 = inlined_call_operand.vmem [shape: f32[16,128], index: 1, kind: output, shape index: {}, may-alias: {0,1}]
  %s2 = sld [smem:[#allocation0]]
  $region14: #{xunet_forward.1} parent=0
    _
  %s4 = ssub.s32 1, %s2
  %s5 = scalar_select 0, %s4, %s2
  // Predicated region
  $region2: #{xunet_forward.1} parent=0 // pred_check
    _
  $region3: #{xunet_forward.1} parent=0 // pred_check_branch
    %7 = sbr.rel (0) target = $region5
  $region4: #{xunet_forward.1} parent=0 // pred_region
    _
  $region5: #{xunet_forward.1} parent=0 // pred_fallthru
    _
  %v8 = vld [vmem:[%s0] sm:$0xff]
  %v9 = vld [vmem:[%s0 + $0x8] sm:$0xff]
  %10 = vst [vmem:[%s1] sm:$0xff] %v8
  %11 = vst [vmem:[%s1 + $0x8] sm:$0xff] %v9
  // Predicated region
  $region6: #{xunet_forward.1} parent=0 // pred_check
    _
  $region7: #{xunet_forward.1} parent=0 // pred_check_branch
    %13 = sbr.rel (0) target = $region9
  $region8: #{xunet_forward.1} parent=0 // pred_region
    _
  $region9: #{xunet_forward.1} parent=0 // pred_fallthru
    _
  // Predicated region
  $region10: #{xunet_forward.1} parent=0 // pred_check
    _
  $region11: #{xunet_forward.1} parent=0 // pred_check_branch
    %15 = sbr.rel (0) target = $region13
  $region12: #{xunet_forward.1} parent=0 // pred_region
    _
  $region13: #{xunet_forward.1} parent=0 // pred_fallthru
    _

</llo_original>
